<compile_context>
chip_gen: v7x
topology: tpu7x:2x2x1
jax: 0.10.0
libtpu: 0.0.40
codegen_flags: <defaults>
</compile_context>

<pallas_src>
import functools
import math

import jax
import jax.numpy as jnp
from jax.experimental import pallas as pl
from jax.experimental.pallas import tpu as pltpu

LANE = 128
MAX_TILE_ROWS = 8192              # (8192, 128) f32 tile = 4 MiB
MIN_BLOCKS = 8                    # keep enough grid steps for dual-TC / megacore
VMEM_BUDGET = 24 * 1024 * 1024    # budget for the double-buffered input streams


def _round_up(a, b):
    return ((a + b - 1) // b) * b


def _ohem_bce_partials_kernel(logits_ref, labels_ref, part_ref, *,
                              thresh, tile_rows, rows_total, need_row_mask):
    x = logits_ref[...].astype(jnp.float32)
    y = labels_ref[...].astype(jnp.float32)
    # BCEWithLogitsLoss(reduction='none'), numerically stable form:
    #   max(x, 0) - x*y + log1p(exp(-|x|))
    loss = jnp.maximum(x, 0.0) - x * y + jnp.log1p(jnp.exp(-jnp.abs(x)))

    hard = loss > thresh
    if need_row_mask:
        # Last block hangs off the edge of the (rows, 128) slab: rows past
        # rows_total contain garbage reads; mask them out of the partials.
        row = jax.lax.broadcasted_iota(jnp.int32, loss.shape, 0)
        valid = (pl.program_id(0) * tile_rows + row) < rows_total
        hard = jnp.logical_and(hard, valid)

    # Per-block, per-lane partials (no cross-step carry -> grid axis "parallel").
    # Count is stored as f32 (exact: <= tile_rows <= 8192 per lane per block).
    part_ref[0, 0:1, :] = jnp.sum(jnp.where(hard, loss, 0.0), axis=0, keepdims=True)
    part_ref[0, 1:2, :] = jnp.sum(hard.astype(jnp.float32), axis=0, keepdims=True)


def ohem_bce_loss(logits, labels, thresh, n_min, *, max_tile_rows=MAX_TILE_ROWS):
    """Forward pass of OhemBCELoss(thresh, n_min). jit-compatible (thresh/n_min static)."""
    assert logits.shape == labels.shape
    # thresh in (0,1) guarantees -log(thresh) > 0 so padded (loss == 0) elements
    # can never count as "hard".
    assert 0.0 < thresh < 1.0, "thresh must be in (0, 1)"
    n = logits.size
    thresh_const = float(-math.log(thresh))   # self.thresh = -log(thresh)

    x = logits.reshape(-1)   # native dtype; upcast inside the kernel
    y = labels.reshape(-1)

    # Lane-dense (rows, 128) view.  Only pad (one copy) when n is not a multiple
    # of 128; typical segmentation shapes take the zero-copy reshape path.
    rows = -(-n // LANE)
    pad = rows * LANE - n
    if pad:
        # loss(x=-1e9, y=0) == 0.0 exactly -> padded elements are never "hard".
        x = jnp.pad(x, (0, pad), constant_values=-1e9)
        y = jnp.pad(y, (0, pad))
    x2 = x.reshape(rows, LANE)
    y2 = y.reshape(rows, LANE)

    # Adaptive tile: as big as possible, but keep >= MIN_BLOCKS grid steps and
    # keep 2x double-buffered input streams inside VMEM_BUDGET.
    bytes_per_row = LANE * (x2.dtype.itemsize + y2.dtype.itemsize)
    vmem_cap = max(8, (VMEM_BUDGET // (2 * bytes_per_row)) // 8 * 8)
    tile_rows = max(8, min(max_tile_rows, vmem_cap,
                           _round_up(-(-rows // MIN_BLOCKS), 8)))
    tile_rows = min(tile_rows, _round_up(rows, 8))
    num_blocks = -(-rows // tile_rows)
    need_row_mask = (rows % tile_rows) != 0

    kernel = functools.partial(
        _ohem_bce_partials_kernel,
        thresh=thresh_const, tile_rows=tile_rows,
        rows_total=rows, need_row_mask=need_row_mask)

    part = pl.pallas_call(
        kernel,
        out_shape=jax.ShapeDtypeStruct((num_blocks, 2, LANE), jnp.float32),
        grid_spec=pltpu.PrefetchScalarGridSpec(
            num_scalar_prefetch=0,
            grid=(num_blocks,),
            in_specs=[
                pl.BlockSpec((tile_rows, LANE), lambda i: (i, 0)),
                pl.BlockSpec((tile_rows, LANE), lambda i: (i, 0)),
            ],
            out_specs=pl.BlockSpec((1, 2, LANE), lambda i: (i, 0, 0)),
        ),
        compiler_params=pltpu.CompilerParams(
            dimension_semantics=("parallel",),
            vmem_limit_bytes=32 * 1024 * 1024),
    )(x2, y2)

    sum_hard = jnp.sum(part[:, 0, :])
    cnt_hard = jnp.sum(part[:, 1, :].astype(jnp.int32))  # exact integer partials

    # OHEM branch: sorted_desc[n_min] > thresh  <=>  count(loss > thresh) > n_min,
    # so the branch decision needs no sort at all; the top-k only runs when the
    # fallback branch is actually taken.
    def _mean_over_thresh(_):
        return sum_hard / jnp.maximum(cnt_hard, 1).astype(jnp.float32)

    def _mean_top_nmin(_):
        # TODO(synk): cross-lane top-k / descending sort has no clean Pallas TPU
        # equivalent; recompute the cheap fused BCE loss and use lax.top_k here.
        lx = logits.reshape(-1).astype(jnp.float32)
        ly = labels.reshape(-1).astype(jnp.float32)
        loss = jnp.maximum(lx, 0.0) - lx * ly + jnp.log1p(jnp.exp(-jnp.abs(lx)))
        # NOTE: PyTorch would raise at loss[n_min] when n_min >= n; we clamp instead.
        k = min(n_min, n)
        top_vals, _ = jax.lax.top_k(loss, k)
        return jnp.mean(top_vals)

    return jax.lax.cond(cnt_hard > n_min, _mean_over_thresh, _mean_top_nmin, None)


def _reference(logits, labels, thresh, n_min):
    """Pure-JAX replica of the PyTorch forward (eager, concrete shapes)."""
    x = logits.reshape(-1).astype(jnp.float32)
    y = labels.reshape(-1).astype(jnp.float32)
    loss = jnp.maximum(x, 0.0) - x * y + jnp.log1p(jnp.exp(-jnp.abs(x)))
    t = -math.log(thresh)
    s = jnp.sort(loss)[::-1]
    if bool(s[n_min] > t):
        return jnp.mean(s[s > t])
    return jnp.mean(s[:n_min])


if __name__ == "__main__":
    key = jax.random.PRNGKey(0)
    ks = jax.random.split(key, 6)
    thresh = 0.7

    # 1) Primary NCHW example (n % 128 == 0 -> zero-copy path; hard-count branch),
    #    run through jit with static thresh/n_min.
    B, C, H, W = 2, 4, 16, 16
    logits = jax.random.normal(ks[0], (B, C, H, W), jnp.float32) * 3.0
    labels = (jax.random.uniform(ks[1], (B, C, H, W)) > 0.5).astype(jnp.float32)
    n_min = (B * H * W) // 4
    fn = jax.jit(ohem_bce_loss, static_argnames=("thresh", "n_min"))
    out = jax.block_until_ready(fn(logits, labels, thresh=thresh, n_min=n_min))
    ref = _reference(logits, labels, thresh, n_min)
    assert jnp.allclose(out, ref, rtol=1e-5, atol=1e-5), (out, ref)

    # 2) Odd shape (n % 128 != 0 -> lane-pad path), tiny forced tiles, multi-block grid.
    logits2 = jax.random.normal(ks[2], (2, 3, 17, 19), jnp.float32) * 2.0
    labels2 = (jax.random.uniform(ks[3], (2, 3, 17, 19)) > 0.5).astype(jnp.float32)
    out2 = jax.block_until_ready(
        ohem_bce_loss(logits2, labels2, thresh, 200, max_tile_rows=8))
    ref2 = _reference(logits2, labels2, thresh, 200)
    assert jnp.allclose(out2, ref2, rtol=1e-5, atol=1e-5), (out2, ref2)

    # 3) rows not divisible by tile_rows (exercises the in-kernel edge-row mask)
    #    and n_min larger than the hard count (exercises the top-k fallback branch).
    logits3 = jax.random.normal(ks[4], (1, 1, 27, 128), jnp.float32) * 3.0
    labels3 = (jax.random.uniform(ks[5], (1, 1, 27, 128)) > 0.5).astype(jnp.float32)
    n_min3 = 3000
    out3 = jax.block_until_ready(ohem_bce_loss(logits3, labels3, thresh, n_min3))
    ref3 = _reference(logits3, labels3, thresh, n_min3)
    assert jnp.allclose(out3, ref3, rtol=1e-5, atol=1e-5), (out3, ref3)

    # 4) Narrow-dtype logits shipped natively (bf16), upcast inside the kernel.
    logits4 = logits.astype(jnp.bfloat16)
    out4 = jax.block_until_ready(fn(logits4, labels, thresh=thresh, n_min=n_min))
    ref4 = _reference(logits4, labels, thresh, n_min)
    assert jnp.allclose(out4, ref4, rtol=1e-5, atol=1e-5), (out4, ref4)

    print("KERNEL_OK")
</pallas_src>

<mosaic_0001>
module attributes {stable_mosaic.version = 11 : i64} {
  func.func @_ohem_bce_partials_kernel(%arg0: i32, %arg1: memref<8x128xf32, #tpu.memory_space<vmem>>, %arg2: memref<8x128xf32, #tpu.memory_space<vmem>>, %arg3: memref<1x2x128xf32, #tpu.memory_space<vmem>>) attributes {dimension_semantics = [#tpu.dimension_semantics<parallel>], iteration_bounds = array<i64: 2>, scalar_prefetch = 0 : i64, scratch_operands = 0 : i64, tpu.core_type = #tpu.core_type<tc>, window_params = [{transform_indices = @transform_0, window_bounds = array<i64: 8, 128>}, {transform_indices = @transform_1, window_bounds = array<i64: 8, 128>}, {transform_indices = @transform_2, window_bounds = array<i64: 1, 2, 128>}]} {
    %c0 = arith.constant 0 : index
    %c0_0 = arith.constant 0 : index
    %0 = vector.load %arg1[%c0, %c0_0] : memref<8x128xf32, #tpu.memory_space<vmem>>, vector<8x128xf32>
    %c0_1 = arith.constant 0 : index
    %c0_2 = arith.constant 0 : index
    %1 = vector.load %arg2[%c0_1, %c0_2] : memref<8x128xf32, #tpu.memory_space<vmem>>, vector<8x128xf32>
    %cst = arith.constant 0.000000e+00 : f32
    %2 = vector.broadcast %cst : f32 to vector<8x128xf32>
    %3 = arith.maximumf %0, %2 : vector<8x128xf32>
    %4 = arith.mulf %0, %1 : vector<8x128xf32>
    %5 = arith.subf %3, %4 : vector<8x128xf32>
    %6 = math.absf %0 : vector<8x128xf32>
    %cst_3 = arith.constant 0.000000e+00 : f32
    %7 = vector.broadcast %cst_3 : f32 to vector<8x128xf32>
    %8 = arith.subf %7, %6 : vector<8x128xf32>
    %9 = math.exp %8 : vector<8x128xf32>
    %10 = math.log1p %9 : vector<8x128xf32>
    %11 = arith.addf %5, %10 : vector<8x128xf32>
    %cst_4 = arith.constant 0.356674939 : f32
    %12 = vector.broadcast %cst_4 : f32 to vector<8x128xf32>
    %13 = arith.cmpf ogt, %11, %12 : vector<8x128xf32>
    %cst_5 = arith.constant 0.000000e+00 : f32
    %14 = vector.broadcast %cst_5 : f32 to vector<8x128xf32>
    %15 = arith.select %13, %11, %14 : vector<8x128xi1>, vector<8x128xf32>
    %cst_6 = arith.constant dense<0.000000e+00> : vector<128xf32>
    %16 = vector.multi_reduction <add>, %15, %cst_6 [0] : vector<8x128xf32> to vector<128xf32>
    %17 = vector.shape_cast %16 : vector<128xf32> to vector<1x128xf32>
    %c0_7 = arith.constant 0 : index
    %c0_8 = arith.constant 0 : index
    %c0_9 = arith.constant 0 : index
    %18 = vector.load %arg3[%c0_7, %c0_8, %c0_9] : memref<1x2x128xf32, #tpu.memory_space<vmem>>, vector<1x1x128xf32>
    %19 = vector.shape_cast %18 : vector<1x1x128xf32> to vector<1x128xf32>
    %20 = vector.shape_cast %17 : vector<1x128xf32> to vector<1x1x128xf32>
    tpu.vector_store %arg3[%c0_7, %c0_8, %c0_9], %20 {strides = array<i32>} : memref<1x2x128xf32, #tpu.memory_space<vmem>>, vector<1x1x128xf32>,
    %21 = arith.extui %13 : vector<8x128xi1> to vector<8x128xi32>
    %22 = arith.sitofp %21 : vector<8x128xi32> to vector<8x128xf32>
    %cst_10 = arith.constant dense<0.000000e+00> : vector<128xf32>
    %23 = vector.multi_reduction <add>, %22, %cst_10 [0] : vector<8x128xf32> to vector<128xf32>
    %24 = vector.shape_cast %23 : vector<128xf32> to vector<1x128xf32>
    %c0_11 = arith.constant 0 : index
    %c1 = arith.constant 1 : index
    %c0_12 = arith.constant 0 : index
    %25 = vector.load %arg3[%c0_11, %c1, %c0_12] : memref<1x2x128xf32, #tpu.memory_space<vmem>>, vector<1x1x128xf32>
    %26 = vector.shape_cast %25 : vector<1x1x128xf32> to vector<1x128xf32>
    %27 = vector.shape_cast %24 : vector<1x128xf32> to vector<1x1x128xf32>
    tpu.vector_store %arg3[%c0_11, %c1, %c0_12], %27 {strides = array<i32>} : memref<1x2x128xf32, #tpu.memory_space<vmem>>, vector<1x1x128xf32>,
    return
  }
  func.func @transform_0(%arg0: i32) -> (i32, i32) {
    %c0_i32 = arith.constant 0 : i32
    %c0_i32_0 = arith.constant 0 : i32
    return %arg0, %c0_i32 : i32, i32
  }
  func.func @transform_1(%arg0: i32) -> (i32, i32) {
    %c0_i32 = arith.constant 0 : i32
    %c0_i32_0 = arith.constant 0 : i32
    return %arg0, %c0_i32 : i32, i32
  }
  func.func @transform_2(%arg0: i32) -> (i32, i32, i32) {
    %c0_i32 = arith.constant 0 : i32
    %c0_i32_0 = arith.constant 0 : i32
    %c0_i32_1 = arith.constant 0 : i32
    return %arg0, %c0_i32, %c0_i32_0 : i32, i32, i32
  }
}

</mosaic_0001>

<llo_original>
// kernel: ohem_bce_loss.1
$region0: #{ohem_bce_loss.1}
  #allocation0 [shape = 'u32[]', space=smem, size = 0x4, offset = 0x4, fixed_abs, tag = 'smem constant byte address 0x4 - core index']
  #allocation1 [shape = 'u32[144,128]{1,0:T(1,128)}', space=vmem, size = 0x12000, scoped, tag = 'internal scratch']
  %s0 = inlined_call_operand.vmem [shape: f32[16,128], index: 0, kind: input, shape index: {}]
  %s1 = inlined_call_operand.vmem [shape: f32[16,128], index: 1, kind: input, shape index: {}]
  %s2 = inlined_call_operand.vmem [shape: f32[2,2,128], index: 2, kind: output, shape index: {}]
  %s3 = sld [smem:[#allocation0]]
  $region41: #{ohem_bce_loss.1} parent=0
    _
  %s5 = ssub.s32 1, %s3
  %s6 = scalar_select 0, %s5, %s3
  loop: start=0, step=1, limit=4
  $region2: #{ohem_bce_loss.1} parent=0 // loop_pre_header
    _
  $region3: #{ohem_bce_loss.1} parent=0 // loop_header
    %s8 = sphi 0, %s12
    %p9 = scmp.ge.s32.totalorder %s8, 4
    %s18 = sphi 0, %s20
    %s21 = sphi 0, %s18
    %s22 = sphi 0, %s21
    %s38 = sphi 0, %s22
    %s44 = sphi 0, %s46
    %s47 = sphi 0, %s44
    %s48 = sphi 0, %s47
    %s64 = sphi 0, %s48
    %s70 = sphi 0, %s72
    %s73 = sphi 0, %s70
    %s74 = sphi 0, %s73
    %s90 = sphi 0, %s74
  $region4: #{ohem_bce_loss.1} parent=0 // loop_header_branch
    %11 = sbr.rel (%p9) target = $region8
  $region5: #{ohem_bce_loss.1} parent=0 // loop_body
    %s13 = ssub.s32 %s8, 1
    %s14 = ssub.s32 %s8, 2
    %s15 = sadd.s32 %s8, 1
    %s16 = ssub.s32 %s8, %s15
    %p17 = scmp.eq.s32.totalorder %s16, 0
    %s19 = sadd.s32 %s18, 1
    %s20 = scalar_select %p17, %s18, %s19
    %p23 = pneg %p17
    %p24 = scmp.eq.s32.totalorder %s8, 1
    %p25 = por %p23, %p24
    %p26 = scmp.ne.s32.totalorder %s18, %s21
    %p27 = scmp.eq.s32.totalorder %s8, 0
    %p28 = por %p26, %p27
    %p29 = scmp.ne.s32.totalorder %s18, %s21
    %p30 = scmp.eq.s32.totalorder %s13, 1
    %p31 = por %p29, %p30
    %p32 = scmp.ne.s32.totalorder %s21, %s22
    %p33 = scmp.eq.s32.totalorder %s13, 0
    %p34 = por %p32, %p33
    %p35 = scmp.ne.s32.totalorder %s21, %s22
    %p36 = scmp.eq.s32.totalorder %s14, 1
    %p37 = por %p35, %p36
    %p39 = scmp.ne.s32.totalorder %s22, %s38
    %p40 = scmp.eq.s32.totalorder %s14, 0
    %p41 = por %p39, %p40
    %s42 = ssub.s32 %s8, %s15
    %p43 = scmp.eq.s32.totalorder %s42, 0
    %s45 = sadd.s32 %s44, 1
    %s46 = scalar_select %p43, %s44, %s45
    %p49 = pneg %p43
    %p50 = scmp.eq.s32.totalorder %s8, 1
    %p51 = por %p49, %p50
    %p52 = scmp.ne.s32.totalorder %s44, %s47
    %p53 = scmp.eq.s32.totalorder %s8, 0
    %p54 = por %p52, %p53
    %p55 = scmp.ne.s32.totalorder %s44, %s47
    %p56 = scmp.eq.s32.totalorder %s13, 1
    %p57 = por %p55, %p56
    %p58 = scmp.ne.s32.totalorder %s47, %s48
    %p59 = scmp.eq.s32.totalorder %s13, 0
    %p60 = por %p58, %p59
    %p61 = scmp.ne.s32.totalorder %s47, %s48
    %p62 = scmp.eq.s32.totalorder %s14, 1
    %p63 = por %p61, %p62
    %p65 = scmp.ne.s32.totalorder %s48, %s64
    %p66 = scmp.eq.s32.totalorder %s14, 0
    %p67 = por %p65, %p66
    %s68 = ssub.s32 %s8, %s15
    %p69 = scmp.eq.s32.totalorder %s68, 0
    %s71 = sadd.s32 %s70, 1
    %s72 = scalar_select %p69, %s70, %s71
    %p75 = pneg %p69
    %p76 = scmp.eq.s32.totalorder %s8, 1
    %p77 = por %p75, %p76
    %p78 = scmp.ne.s32.totalorder %s70, %s73
    %p79 = scmp.eq.s32.totalorder %s8, 0
    %p80 = por %p78, %p79
    %p81 = scmp.ne.s32.totalorder %s70, %s73
    %p82 = scmp.eq.s32.totalorder %s13, 1
    %p83 = por %p81, %p82
    %p84 = scmp.ne.s32.totalorder %s73, %s74
    %p85 = scmp.eq.s32.totalorder %s13, 0
    %p86 = por %p84, %p85
    %p87 = scmp.ne.s32.totalorder %s73, %s74
    %p88 = scmp.eq.s32.totalorder %s14, 1
    %p89 = por %p87, %p88
    %p91 = scmp.ne.s32.totalorder %s74, %s90
    %p92 = scmp.eq.s32.totalorder %s14, 0
    %p93 = por %p91, %p92
    %p94 = scmp.le.s32.totalorder 1, %s8
    %p95 = scmp.lt.s32.totalorder %s8, 3
    %p96 = pnand %p94, %p95
    %p97 = pneg %p96
    // Predicated region
    $region9: #{ohem_bce_loss.1} parent=5 // pred_check
      _
    $region10: #{ohem_bce_loss.1} parent=5 // pred_check_branch
      %99 = sbr.rel (%p96) target = $region12
    $region11: #{ohem_bce_loss.1} parent=5 // pred_region
      %s100 = ssub.s32 %s8, 1
    $region12: #{ohem_bce_loss.1} parent=5 // pred_fallthru
      _
    %p101 = scmp.lt.s32.totalorder %s8, 2
    // Predicated region
    $region13: #{ohem_bce_loss.1} parent=5 // pred_check
      %p102 = pneg %p101
    $region14: #{ohem_bce_loss.1} parent=5 // pred_check_branch
      %104 = sbr.rel (%p102) target = $region16
    $region15: #{ohem_bce_loss.1} parent=5 // pred_region
      // Predicated region
      $region17: #{ohem_bce_loss.1} parent=15 // pred_check
        %p105 = pneg %p28
      $region18: #{ohem_bce_loss.1} parent=15 // pred_check_branch
        %107 = sbr.rel (%p105) target = $region20
      $region19: #{ohem_bce_loss.1} parent=15 // pred_region
        %p108 = scmp.lt.s32.totalorder %s8, 1
        %s109 = scalar_select %p108, %s8, 1
        %s110 = smul.addr %s109, 8
        %s111 = scalar_lea.vmem %s0, %s110
      $region20: #{ohem_bce_loss.1} parent=15 // pred_fallthru
        _
      // Predicated region
      $region21: #{ohem_bce_loss.1} parent=15 // pred_check
        %p112 = pneg %p54
      $region22: #{ohem_bce_loss.1} parent=15 // pred_check_branch
        %114 = sbr.rel (%p112) target = $region24
      $region23: #{ohem_bce_loss.1} parent=15 // pred_region
        %p115 = scmp.lt.s32.totalorder %s8, 1
        %s116 = scalar_select %p115, %s8, 1
        %s117 = smul.addr %s116, 8
        %s118 = scalar_lea.vmem %s1, %s117
      $region24: #{ohem_bce_loss.1} parent=15 // pred_fallthru
        _
    $region16: #{ohem_bce_loss.1} parent=5 // pred_fallthru
      _
    %p119 = scmp.le.s32.totalorder 1, %s8
    %p120 = scmp.lt.s32.totalorder %s8, 3
    %p121 = pnand %p119, %p120
    %p122 = pneg %p121
    // Predicated region
    $region25: #{ohem_bce_loss.1} parent=5 // pred_check
      _
    $region26: #{ohem_bce_loss.1} parent=5 // pred_check_branch
      %124 = sbr.rel (%p121) target = $region28
    $region27: #{ohem_bce_loss.1} parent=5 // pred_region
      %s125 = ssub.s32 %s8, 1
      %p126 = scmp.lt.s32.totalorder %s13, 1
      %s127 = scalar_select %p126, %s13, 1
      %s128 = smul.addr %s127, 8
      %s129 = scalar_lea.vmem %s0, %s128
      %p130 = pneg %p34
      %p131 = pneg %p31
      %p132 = scmp.lt.s32.totalorder %s13, 1
      %s133 = scalar_select %p132, %s13, 1
      %s134 = smul.addr %s133, 8
      %s135 = scalar_lea.vmem %s1, %s134
      %p136 = pneg %p60
      %p137 = pneg %p57
      %p138 = pneg %p86
      %p139 = pneg %p83
      %p140 = scmp.lt.s32.totalorder %s13, 1
      %s141 = scalar_select %p140, %s13, 1
      %s142 = smul.addr %s141, 2
      %s143 = scalar_lea.vmem %s2, %s142
      %p144 = scmp.lt.s32.totalorder %s13, 1
      %s145 = scalar_select %p144, %s13, 1
      %s146 = smul.addr %s145, 8
      %s147 = scalar_lea.vmem %s0, %s146
      %p148 = scmp.lt.s32.totalorder %s13, 1
      %s149 = scalar_select %p148, %s13, 1
      %s150 = smul.addr %s149, 8
      %s151 = scalar_lea.vmem %s1, %s150
      %p152 = scmp.lt.s32.totalorder %s13, 1
      %s153 = scalar_select %p152, %s13, 1
      %s154 = smul.addr %s153, 2
      %s155 = scalar_lea.vmem %s2, %s154
      %v156 = vld [vmem:[%s147] sm:$0xff]
      %v157 = vld [vmem:[%s151] sm:$0xff]
      %v158 = vmax.f32 %v156, 0.0
      %v159 = vmul.f32 %v156, %v157
      %v160 = vsub.f32 %v158, %v159
      %v161 = vand.u32 2147483647, %v156
      %v162 = vsub.f32 0.0, %v161
      %v163 = vmul.f32 %v162, 1.442695
      %v164 = vpow.pop %v163
      %v165 = vadd.f32 %v164, 1.0
      %v166 = vlog2.pop %v165
      %v167 = vmul.f32 %v166, 0.6931472
      %v168 = vmul.f32 -0.5, %v164
      %v169 = vadd.f32 %v168, 1.0
      %v170 = vmul.f32 %v169, %v164
      %v171 = vand.u32 2147483647, %v164
      %vm172 = vcmp.lt.f32.partialorder %v171, 0.0004427343
      %v173 = vsel %vm172, %v170, %v167
      %v174 = vadd.f32 %v160, %v173
      %vm175 = vcmp.gt.f32.partialorder %v174, 0.35667494
      %v176 = vsel %vm175, %v174, 0.0
      %v177 = vrot.slane %v176, 4
      %v178 = vadd.f32 %v176, %v177
      %v179 = vrot.slane %v178, 2
      %v180 = vadd.f32 %v178, %v179
      %v181 = vrot.slane %v180, 1
      %v182 = vadd.f32 %v180, %v181
      %183 = vst [vmem:[%s155] sm:$0x1] %v182
      %v184 = vsel %vm175, 1, 0
      %v185 = vcvt.s32.f32 %v184
      %v186 = vrot.slane %v185, 4
      %v187 = vadd.f32 %v185, %v186
      %v188 = vrot.slane %v187, 2
      %v189 = vadd.f32 %v187, %v188
      %v190 = vrot.slane %v189, 1
      %v191 = vadd.f32 %v189, %v190
      %192 = vst [vmem:[%s155 + $0x1] sm:$0x1] %v191
      %p193 = scmp.lt.s32.totalorder %s13, 1
      %s194 = scalar_select %p193, %s13, 1
      %s195 = smul.addr %s194, 2
      %s196 = scalar_lea.vmem %s2, %s195
      // Predicated region
      $region29: #{ohem_bce_loss.1} parent=27 // pred_check
        %p197 = pneg %p83
      $region30: #{ohem_bce_loss.1} parent=27 // pred_check_branch
        %199 = sbr.rel (%p197) target = $region32
      $region31: #{ohem_bce_loss.1} parent=27 // pred_region
        _
      $region32: #{ohem_bce_loss.1} parent=27 // pred_fallthru
        _
    $region28: #{ohem_bce_loss.1} parent=5 // pred_fallthru
      _
    %p200 = scmp.le.s32.totalorder 2, %s8
    // Predicated region
    $region33: #{ohem_bce_loss.1} parent=5 // pred_check
      %p201 = pneg %p200
    $region34: #{ohem_bce_loss.1} parent=5 // pred_check_branch
      %203 = sbr.rel (%p201) target = $region36
    $region35: #{ohem_bce_loss.1} parent=5 // pred_region
      %s204 = ssub.s32 %s8, 2
      // Predicated region
      $region37: #{ohem_bce_loss.1} parent=35 // pred_check
        %p205 = pneg %p89
      $region38: #{ohem_bce_loss.1} parent=35 // pred_check_branch
        %207 = sbr.rel (%p205) target = $region40
      $region39: #{ohem_bce_loss.1} parent=35 // pred_region
        %p208 = scmp.lt.s32.totalorder %s14, 1
        %s209 = scalar_select %p208, %s14, 1
        %s210 = smul.addr %s209, 2
        %s211 = scalar_lea.vmem %s2, %s210
      $region40: #{ohem_bce_loss.1} parent=35 // pred_fallthru
        _
    $region36: #{ohem_bce_loss.1} parent=5 // pred_fallthru
      _
  $region6: #{ohem_bce_loss.1} parent=0 // loop_footer
    %s12 = sadd.s32 1, %s8
  $region7: #{ohem_bce_loss.1} parent=0 // loop_footer_branch
    %7 = sbr.rel target = $region3
  $region8: #{ohem_bce_loss.1} parent=0 // loop_exit
    _

</llo_original>
